<compile_context>
chip_gen: v7x
topology: tpu7x:2x2x1
jax: 0.10.0
libtpu: 0.0.40
codegen_flags: <defaults>
</compile_context>

<pallas_src>
import jax
import jax.numpy as jnp
from jax.experimental import pallas as pl
from jax.experimental.pallas import tpu as pltpu

EPS = 1e-5
_MIB = 1024 * 1024


def _layernorm_nchw_kernel(x_ref, gamma_ref, beta_ref, o_ref):
    # x_ref / o_ref: (Nb, C, T) tile; gamma_ref / beta_ref: (1, C, 1) float32.
    x = x_ref[...].astype(jnp.float32)                   # (Nb, C, T)
    mean = jnp.mean(x, axis=1, keepdims=True)            # (Nb, 1, T)
    xc = x - mean
    var = jnp.mean(xc * xc, axis=1, keepdims=True)       # biased var (PyTorch LN)
    inv = jax.lax.rsqrt(var + EPS)
    y = (xc * inv) * gamma_ref[...] + beta_ref[...]      # broadcast over lanes/Nb
    o_ref[...] = y.astype(o_ref.dtype)


def _round_up(x, m):
    return ((x + m - 1) // m) * m


def _vmem_budget_bytes():
    """(scoped limit we request, physical capacity) — generation-aware."""
    try:
        cap = int(pltpu.get_tpu_info().vmem_capacity_bytes)
    except Exception:
        cap = 64 * _MIB  # conservative default: v7x per-TensorCore VMEM
    cap = max(cap, 32 * _MIB)
    # ~48 MiB on v7x (64 MiB physical), ~96 MiB on v5e/v6e (128 MiB physical).
    return min(cap * 3 // 4, 96 * _MIB), cap


def layernorm2d(x_nchw, gamma, beta):
    """Pallas equivalent of PyTorch LayerNorm2d forward (NCHW in / NCHW out)."""
    N, C, H, W = x_nchw.shape
    HW = H * W
    itemsize = jnp.dtype(x_nchw.dtype).itemsize

    vmem_limit, vmem_cap = _vmem_budget_bytes()
    headroom = 4 * _MIB
    # Live VMEM per block element: double-buffered in + out blocks in the
    # native dtype, plus ~3 full-block f32 temporaries inside the kernel body.
    per_elem_bytes = 4 * itemsize + 3 * 4

    # Large-C guard: even the minimal (1, C, 128) block must fit the budget.
    min_block_bytes = C * 128 * per_elem_bytes
    if min_block_bytes + headroom > vmem_limit:
        vmem_limit = min(vmem_cap - 8 * _MIB, min_block_bytes + headroom)
        if min_block_bytes + headroom > vmem_limit:
            raise ValueError(
                f"LayerNorm2d: C={C} needs {min_block_bytes / _MIB:.1f} MiB per "
                f"minimal block; does not fit VMEM ({vmem_cap / _MIB:.0f} MiB)."
            )

    max_block_elems = max(C * 128, (vmem_limit - headroom) // per_elem_bytes)

    # Lane tile over H*W: a multiple of 128 (or the full axis when H*W <= 128),
    # never larger than H*W so the only partial block is the trailing one.
    if HW <= 128:
        hw_tile = HW
    else:
        lane_cap = (HW // 128) * 128
        budget_tile = max(128, (max_block_elems // C) // 128 * 128)
        hw_tile = min(lane_cap, budget_tile)

    # Batch several samples per block when one sample's lane tile is small.
    nb = int(max(1, min(N, max_block_elems // max(1, C * hw_tile))))

    steps_hw = pl.cdiv(HW, hw_tile)
    steps_n = pl.cdiv(N, nb)
    # v7x megacore: guarantee >= 2 grid steps whenever the shape allows it.
    if steps_hw * steps_n < 2:
        if hw_tile > 128:
            hw_tile = max(128, _round_up(pl.cdiv(HW, 2), 128))
            steps_hw = pl.cdiv(HW, hw_tile)
        elif nb > 1:
            nb = pl.cdiv(nb, 2)
            steps_n = pl.cdiv(N, nb)

    x3 = x_nchw.reshape(N, C, HW)
    gamma3 = gamma.reshape(1, C, 1).astype(jnp.float32)
    beta3 = beta.reshape(1, C, 1).astype(jnp.float32)

    y3 = pl.pallas_call(
        _layernorm_nchw_kernel,
        out_shape=jax.ShapeDtypeStruct((N, C, HW), x3.dtype),
        grid_spec=pltpu.PrefetchScalarGridSpec(
            num_scalar_prefetch=0,
            grid=(steps_n, steps_hw),
            in_specs=[
                pl.BlockSpec((nb, C, hw_tile), lambda n, t: (n, 0, t)),
                pl.BlockSpec((1, C, 1), lambda n, t: (0, 0, 0)),
                pl.BlockSpec((1, C, 1), lambda n, t: (0, 0, 0)),
            ],
            out_specs=pl.BlockSpec((nb, C, hw_tile), lambda n, t: (n, 0, t)),
        ),
        compiler_params=pltpu.CompilerParams(
            dimension_semantics=("parallel", "parallel"),
            vmem_limit_bytes=int(vmem_limit),
        ),
    )(x3, gamma3, beta3)

    return y3.reshape(N, C, H, W)


def _reference(x_nchw, gamma, beta):
    x_nhwc = jnp.transpose(x_nchw, (0, 2, 3, 1))
    mean = jnp.mean(x_nhwc, axis=-1, keepdims=True)
    var = jnp.mean((x_nhwc - mean) ** 2, axis=-1, keepdims=True)
    ref = (x_nhwc - mean) / jnp.sqrt(var + EPS) * gamma + beta
    return jnp.transpose(ref, (0, 3, 1, 2))


if __name__ == "__main__":
    key = jax.random.PRNGKey(0)
    N, C, H, W = 2, 4, 16, 16
    x = jax.random.normal(key, (N, C, H, W), dtype=jnp.float32)

    # nn.LayerNorm default init: weight (gamma) = ones(C), bias (beta) = zeros(C).
    gamma = jnp.ones((C,), dtype=jnp.float32)
    beta = jnp.zeros((C,), dtype=jnp.float32)

    out = jax.block_until_ready(layernorm2d(x, gamma, beta))
    ref = _reference(x, gamma, beta)
    assert out.shape == (N, C, H, W)
    assert jnp.allclose(out, ref, atol=1e-5, rtol=1e-5)

    # Non-128-divisible spatial size exercises the masked trailing-block path
    # (no host-side pad / slice anymore).
    x2 = jax.random.normal(jax.random.PRNGKey(1), (N, C, 15, 15), dtype=jnp.float32)
    out2 = jax.block_until_ready(layernorm2d(x2, gamma, beta))
    ref2 = _reference(x2, gamma, beta)
    assert out2.shape == (N, C, 15, 15)
    assert jnp.allclose(out2, ref2, atol=1e-5, rtol=1e-5)

    print("KERNEL_OK")
</pallas_src>

<mosaic_0001>
module attributes {stable_mosaic.version = 11 : i64} {
  func.func @_layernorm_nchw_kernel(%arg0: i32, %arg1: i32, %arg2: memref<2x4x128xf32, #tpu.memory_space<vmem>>, %arg3: memref<1x4x1xf32, #tpu.memory_space<vmem>>, %arg4: memref<1x4x1xf32, #tpu.memory_space<vmem>>, %arg5: memref<2x4x128xf32, #tpu.memory_space<vmem>>) attributes {dimension_semantics = [#tpu.dimension_semantics<parallel>, #tpu.dimension_semantics<parallel>], iteration_bounds = array<i64: 1, 2>, scalar_prefetch = 0 : i64, scratch_operands = 0 : i64, tpu.core_type = #tpu.core_type<tc>, window_params = [{transform_indices = @transform_0, window_bounds = array<i64: 2, 4, 128>}, {pipeline_mode = #tpu.pipeline_mode<synchronous>, transform_indices = @transform_1, window_bounds = array<i64: 1, 4, 1>}, {pipeline_mode = #tpu.pipeline_mode<synchronous>, transform_indices = @transform_2, window_bounds = array<i64: 1, 4, 1>}, {transform_indices = @transform_3, window_bounds = array<i64: 2, 4, 128>}]} {
    %c0 = arith.constant 0 : index
    %c0_0 = arith.constant 0 : index
    %c0_1 = arith.constant 0 : index
    %0 = vector.load %arg2[%c0, %c0_0, %c0_1] : memref<2x4x128xf32, #tpu.memory_space<vmem>>, vector<2x4x128xf32>
    %cst = arith.constant dense<0.000000e+00> : vector<2x128xf32>
    %1 = vector.multi_reduction <add>, %0, %cst [1] : vector<2x4x128xf32> to vector<2x128xf32>
    %2 = vector.shape_cast %1 : vector<2x128xf32> to vector<2x1x128xf32>
    %cst_2 = arith.constant 4.000000e+00 : f32
    %3 = vector.broadcast %cst_2 : f32 to vector<2x1x128xf32>
    %4 = arith.divf %2, %3 : vector<2x1x128xf32>
    %5 = vector.broadcast %4 : vector<2x1x128xf32> to vector<2x4x128xf32>
    %6 = arith.subf %0, %5 : vector<2x4x128xf32>
    %7 = arith.mulf %6, %6 : vector<2x4x128xf32>
    %cst_3 = arith.constant dense<0.000000e+00> : vector<2x128xf32>
    %8 = vector.multi_reduction <add>, %7, %cst_3 [1] : vector<2x4x128xf32> to vector<2x128xf32>
    %9 = vector.shape_cast %8 : vector<2x128xf32> to vector<2x1x128xf32>
    %cst_4 = arith.constant 4.000000e+00 : f32
    %10 = vector.broadcast %cst_4 : f32 to vector<2x1x128xf32>
    %11 = arith.divf %9, %10 : vector<2x1x128xf32>
    %cst_5 = arith.constant 9.99999974E-6 : f32
    %12 = vector.broadcast %cst_5 : f32 to vector<2x1x128xf32>
    %13 = arith.addf %11, %12 : vector<2x1x128xf32>
    %14 = math.rsqrt %13 : vector<2x1x128xf32>
    %15 = vector.broadcast %14 : vector<2x1x128xf32> to vector<2x4x128xf32>
    %16 = arith.mulf %6, %15 : vector<2x4x128xf32>
    %c0_6 = arith.constant 0 : index
    %c0_7 = arith.constant 0 : index
    %c0_8 = arith.constant 0 : index
    %17 = vector.load %arg3[%c0_6, %c0_7, %c0_8] : memref<1x4x1xf32, #tpu.memory_space<vmem>>, vector<1x4x1xf32>
    %18 = vector.broadcast %17 : vector<1x4x1xf32> to vector<2x4x128xf32>
    %19 = arith.mulf %16, %18 : vector<2x4x128xf32>
    %c0_9 = arith.constant 0 : index
    %c0_10 = arith.constant 0 : index
    %c0_11 = arith.constant 0 : index
    %20 = vector.load %arg4[%c0_9, %c0_10, %c0_11] : memref<1x4x1xf32, #tpu.memory_space<vmem>>, vector<1x4x1xf32>
    %21 = vector.broadcast %20 : vector<1x4x1xf32> to vector<2x4x128xf32>
    %22 = arith.addf %19, %21 : vector<2x4x128xf32>
    %c0_12 = arith.constant 0 : index
    %c0_13 = arith.constant 0 : index
    %c0_14 = arith.constant 0 : index
    %23 = vector.load %arg5[%c0_12, %c0_13, %c0_14] : memref<2x4x128xf32, #tpu.memory_space<vmem>>, vector<2x4x128xf32>
    tpu.vector_store %arg5[%c0_12, %c0_13, %c0_14], %22 {strides = array<i32>} : memref<2x4x128xf32, #tpu.memory_space<vmem>>, vector<2x4x128xf32>,
    return
  }
  func.func @transform_0(%arg0: i32, %arg1: i32) -> (i32, i32, i32) {
    %c0_i32 = arith.constant 0 : i32
    %c0_i32_0 = arith.constant 0 : i32
    return %arg0, %c0_i32, %arg1 : i32, i32, i32
  }
  func.func @transform_1(%arg0: i32, %arg1: i32) -> (i32, i32, i32) {
    %c0_i32 = arith.constant 0 : i32
    %c0_i32_0 = arith.constant 0 : i32
    %c0_i32_1 = arith.constant 0 : i32
    %c0_i32_2 = arith.constant 0 : i32
    return %c0_i32, %c0_i32_0, %c0_i32_1 : i32, i32, i32
  }
  func.func @transform_2(%arg0: i32, %arg1: i32) -> (i32, i32, i32) {
    %c0_i32 = arith.constant 0 : i32
    %c0_i32_0 = arith.constant 0 : i32
    %c0_i32_1 = arith.constant 0 : i32
    %c0_i32_2 = arith.constant 0 : i32
    return %c0_i32, %c0_i32_0, %c0_i32_1 : i32, i32, i32
  }
  func.func @transform_3(%arg0: i32, %arg1: i32) -> (i32, i32, i32) {
    %c0_i32 = arith.constant 0 : i32
    %c0_i32_0 = arith.constant 0 : i32
    return %arg0, %c0_i32, %arg1 : i32, i32, i32
  }
}

</mosaic_0001>

<llo_original>
// kernel: tpu_custom_call.1
$region0: #{tpu_custom_call.1}
  #allocation0 [shape = 'u32[]', space=smem, size = 0x4, offset = 0x4, fixed_abs, tag = 'smem constant byte address 0x4 - core index']
  #allocation1 [shape = 'u32[144,128]{1,0:T(1,128)}', space=vmem, size = 0x12000, scoped, tag = 'internal scratch']
  %s0 = inlined_call_operand.hbm [shape: f32[2,4,256], index: 0, kind: input, shape index: {}]
  %s1 = inlined_call_operand.vmem [shape: f32[1,4,1], index: 1, kind: input, shape index: {}]
  %s2 = inlined_call_operand.vmem [shape: f32[1,4,1], index: 2, kind: input, shape index: {}]
  %s3 = inlined_call_operand.hbm [shape: f32[2,4,256], index: 3, kind: output, shape index: {}]
  %s4 = sld [smem:[#allocation0]]
  $region49: #{tpu_custom_call.1} parent=0
    _
  %s6 = ssub.s32 1, %s4
  %s7 = scalar_select 0, %s6, %s4
  $region1: #{tpu_custom_call.1} parent=0
    #allocation2 [shape = 'u8[8192]{0}', space=vmem, size = 0x2000, scoped, tag = 'input window, operand 0']
    #allocation3 [shape = 's32[2]{0}', space=sflag, size = 0x8, scoped, tag = 'scoped memory for tpu_custom_call.1']
    #allocation4 [shape = 's32[2]{0}', space=sflag, size = 0x8, scoped, tag = 'scoped memory for tpu_custom_call.1']
    #allocation5 [shape = 'u8[8192]{0}', space=vmem, size = 0x2000, scoped, tag = 'output window, operand 0']
    %8 = vsyncpa [#allocation3], 0
    %s9 = scalar_lea.sflag [#allocation3], 1
    %10 = vsyncpa %s9, 0
    %11 = vsyncpa [#allocation4], 0
    %s12 = scalar_lea.sflag [#allocation4], 1
    %13 = vsyncpa %s12, 0
    loop: start=0, step=1, limit=4
    $region2: #{tpu_custom_call.1} parent=1 // loop_pre_header
      _
    $region3: #{tpu_custom_call.1} parent=1 // loop_header
      %s15 = sphi 0, %s19
      %p16 = scmp.ge.s32.totalorder %s15, 4
      %s22 = sphi 0, %s34
      %s23 = sphi 0, %s30
      %s24 = sphi 0, %s22
      %s25 = sphi 0, %s23
      %s26 = sphi 0, %s24
      %s27 = sphi 0, %s25
      %s39 = sphi 0, %s41
      %s42 = sphi 0, %s39
      %s43 = sphi 0, %s42
      %s59 = sphi 0, %s43
      %s63 = sphi 0, %s63
      %s65 = sphi 0, %s63
      %s66 = sphi 0, %s65
      %s80 = sphi 0, %s66
      %s84 = sphi 0, %s84
      %s86 = sphi 0, %s84
      %s87 = sphi 0, %s86
      %s101 = sphi 0, %s87
      %s109 = sphi 0, %s111
      %s112 = sphi 0, %s109
      %s113 = sphi 0, %s112
      %s129 = sphi 0, %s113
    $region4: #{tpu_custom_call.1} parent=1 // loop_header_branch
      %18 = sbr.rel (%p16) target = $region8
    $region5: #{tpu_custom_call.1} parent=1 // loop_body
      %s20 = ssub.s32 %s15, 1
      %s21 = ssub.s32 %s15, 2
      %s28 = sadd.s32 1, %s23
      %p29 = scmp.ge.s32.totalorder %s28, 2
      %s30 = scalar_select %p29, 0, %s28
      %s31 = sadd.s32 1, %s22
      %s32 = scalar_select %p29, %s31, %s22
      %p33 = scmp.ge.s32.totalorder %s32, 1
      %s34 = scalar_select %p33, 0, %s32
      %s35 = ssub.s32 %s22, %s34
      %s36 = ssub.s32 %s23, %s30
      %s37 = sor.u32 %s35, %s36
      %p38 = scmp.eq.s32.totalorder %s37, 0
      %s40 = sadd.s32 %s39, 1
      %s41 = scalar_select %p38, %s39, %s40
      %p44 = pneg %p38
      %p45 = scmp.eq.s32.totalorder %s15, 1
      %p46 = por %p44, %p45
      %p47 = scmp.ne.s32.totalorder %s39, %s42
      %p48 = scmp.eq.s32.totalorder %s15, 0
      %p49 = por %p47, %p48
      %p50 = scmp.ne.s32.totalorder %s39, %s42
      %p51 = scmp.eq.s32.totalorder %s20, 1
      %p52 = por %p50, %p51
      %p53 = scmp.ne.s32.totalorder %s42, %s43
      %p54 = scmp.eq.s32.totalorder %s20, 0
      %p55 = por %p53, %p54
      %p56 = scmp.ne.s32.totalorder %s42, %s43
      %p57 = scmp.eq.s32.totalorder %s21, 1
      %p58 = por %p56, %p57
      %p60 = scmp.ne.s32.totalorder %s43, %s59
      %p61 = scmp.eq.s32.totalorder %s21, 0
      %p62 = por %p60, %p61
      %s64 = sadd.s32 %s63, 1
      %p67 = scmp.eq.s32.totalorder %s15, 1
      %p68 = scmp.ne.s32.totalorder %s63, %s65
      %p69 = scmp.eq.s32.totalorder %s15, 0
      %p70 = por %p68, %p69
      %p71 = scmp.ne.s32.totalorder %s63, %s65
      %p72 = scmp.eq.s32.totalorder %s20, 1
      %p73 = por %p71, %p72
      %p74 = scmp.ne.s32.totalorder %s65, %s66
      %p75 = scmp.eq.s32.totalorder %s20, 0
      %p76 = por %p74, %p75
      %p77 = scmp.ne.s32.totalorder %s65, %s66
      %p78 = scmp.eq.s32.totalorder %s21, 1
      %p79 = por %p77, %p78
      %p81 = scmp.ne.s32.totalorder %s66, %s80
      %p82 = scmp.eq.s32.totalorder %s21, 0
      %p83 = por %p81, %p82
      %s85 = sadd.s32 %s84, 1
      %p88 = scmp.eq.s32.totalorder %s15, 1
      %p89 = scmp.ne.s32.totalorder %s84, %s86
      %p90 = scmp.eq.s32.totalorder %s15, 0
      %p91 = por %p89, %p90
      %p92 = scmp.ne.s32.totalorder %s84, %s86
      %p93 = scmp.eq.s32.totalorder %s20, 1
      %p94 = por %p92, %p93
      %p95 = scmp.ne.s32.totalorder %s86, %s87
      %p96 = scmp.eq.s32.totalorder %s20, 0
      %p97 = por %p95, %p96
      %p98 = scmp.ne.s32.totalorder %s86, %s87
      %p99 = scmp.eq.s32.totalorder %s21, 1
      %p100 = por %p98, %p99
      %p102 = scmp.ne.s32.totalorder %s87, %s101
      %p103 = scmp.eq.s32.totalorder %s21, 0
      %p104 = por %p102, %p103
      %s105 = ssub.s32 %s22, %s34
      %s106 = ssub.s32 %s23, %s30
      %s107 = sor.u32 %s105, %s106
      %p108 = scmp.eq.s32.totalorder %s107, 0
      %s110 = sadd.s32 %s109, 1
      %s111 = scalar_select %p108, %s109, %s110
      %p114 = pneg %p108
      %p115 = scmp.eq.s32.totalorder %s15, 1
      %p116 = por %p114, %p115
      %p117 = scmp.ne.s32.totalorder %s109, %s112
      %p118 = scmp.eq.s32.totalorder %s15, 0
      %p119 = por %p117, %p118
      %p120 = scmp.ne.s32.totalorder %s109, %s112
      %p121 = scmp.eq.s32.totalorder %s20, 1
      %p122 = por %p120, %p121
      %p123 = scmp.ne.s32.totalorder %s112, %s113
      %p124 = scmp.eq.s32.totalorder %s20, 0
      %p125 = por %p123, %p124
      %p126 = scmp.ne.s32.totalorder %s112, %s113
      %p127 = scmp.eq.s32.totalorder %s21, 1
      %p128 = por %p126, %p127
      %p130 = scmp.ne.s32.totalorder %s113, %s129
      %p131 = scmp.eq.s32.totalorder %s21, 0
      %p132 = por %p130, %p131
      %p133 = scmp.le.s32.totalorder 1, %s15
      %p134 = scmp.lt.s32.totalorder %s15, 3
      %p135 = pnand %p133, %p134
      %p136 = pneg %p135
      // Predicated region
      $region9: #{tpu_custom_call.1} parent=5 // pred_check
        _
      $region10: #{tpu_custom_call.1} parent=5 // pred_check_branch
        %138 = sbr.rel (%p135) target = $region12
      $region11: #{tpu_custom_call.1} parent=5 // pred_region
        %s139 = ssub.s32 %s15, 1
        // Predicated region
        $region13: #{tpu_custom_call.1} parent=11 // pred_check
          %p140 = pneg %p76
        $region14: #{tpu_custom_call.1} parent=11 // pred_check_branch
          %142 = sbr.rel (%p140) target = $region16
        $region15: #{tpu_custom_call.1} parent=11 // pred_region
          _
        $region16: #{tpu_custom_call.1} parent=11 // pred_fallthru
          _
        // Predicated region
        $region17: #{tpu_custom_call.1} parent=11 // pred_check
          %p143 = pneg %p97
        $region18: #{tpu_custom_call.1} parent=11 // pred_check_branch
          %145 = sbr.rel (%p143) target = $region20
        $region19: #{tpu_custom_call.1} parent=11 // pred_region
          _
        $region20: #{tpu_custom_call.1} parent=11 // pred_fallthru
          _
      $region12: #{tpu_custom_call.1} parent=5 // pred_fallthru
        _
      %p146 = scmp.lt.s32.totalorder %s15, 2
      // Predicated region
      $region21: #{tpu_custom_call.1} parent=5 // pred_check
        %p147 = pneg %p146
      $region22: #{tpu_custom_call.1} parent=5 // pred_check_branch
        %149 = sbr.rel (%p147) target = $region24
      $region23: #{tpu_custom_call.1} parent=5 // pred_region
        // Predicated region
        $region25: #{tpu_custom_call.1} parent=23 // pred_check
          %p150 = pneg %p49
        $region26: #{tpu_custom_call.1} parent=23 // pred_check_branch
          %152 = sbr.rel (%p150) target = $region28
        $region27: #{tpu_custom_call.1} parent=23 // pred_region
          %s153 = sand.u32 %s39, 1
          %s154 = scalar_lea.sflag [#allocation3], %s153
          %s155 = sand.u32 %s39, 1
          %s156 = smul.addr %s155, 8
          %s157 = scalar_lea.vmem [#allocation2], %s156
          %s158 = smul.u32 2, %s22
          %s160 = ssub.s32 128, 128
          %161 = vsyncadd %s154, %s160
          %s162 = smul.addr %s158, 2
          %s163 = sadd.s32 %s23, %s162
          %s164 = smul.addr %s163, 64
          %s165 = scalar_lea.hbm %s0, %s164
          %s166 = sshll.u32 %s157, 4
          %s167 = int_to_ptr.vmem [resolvable:$true] %s166
          %172 = dma.hbm_to_vmem [thread:$0]  %s165, 128, %s167, %s154, 128, 64, 4
        $region28: #{tpu_custom_call.1} parent=23 // pred_fallthru
          _
      $region24: #{tpu_custom_call.1} parent=5 // pred_fallthru
        _
      %p173 = scmp.le.s32.totalorder 1, %s15
      %p174 = scmp.lt.s32.totalorder %s15, 3
      %p175 = pnand %p173, %p174
      %p176 = pneg %p175
      // Predicated region
      $region29: #{tpu_custom_call.1} parent=5 // pred_check
        _
      $region30: #{tpu_custom_call.1} parent=5 // pred_check_branch
        %178 = sbr.rel (%p175) target = $region32
      $region31: #{tpu_custom_call.1} parent=5 // pred_region
        %s179 = ssub.s32 %s15, 1
        %s180 = sand.u32 %s42, 1
        %s181 = scalar_lea.sflag [#allocation3], %s180
        %s182 = sand.u32 %s42, 1
        %s183 = smul.addr %s182, 8
        %s184 = scalar_lea.vmem [#allocation2], %s183
        // Predicated region
        $region33: #{tpu_custom_call.1} parent=31 // pred_check
          %p185 = pneg %p55
        $region34: #{tpu_custom_call.1} parent=31 // pred_check_branch
          %187 = sbr.rel (%p185) target = $region36
        $region35: #{tpu_custom_call.1} parent=31 // pred_region
          %188 = dma.done %s181, 128
        $region36: #{tpu_custom_call.1} parent=31 // pred_fallthru
          _
        %s189 = sand.u32 %s42, 1
        %s190 = scalar_lea.sflag [#allocation3], %s189
        %s191 = sand.u32 %s42, 1
        %s192 = smul.addr %s191, 8
        %s193 = scalar_lea.vmem [#allocation2], %s192
        %p194 = pneg %p55
        %p195 = pneg %p52
        %p196 = pneg %p76
        %p197 = pneg %p73
        %p198 = pneg %p97
        %p199 = pneg %p94
        %p200 = pneg %p125
        %p201 = pneg %p122
        %s202 = sand.u32 %s112, 1
        %s203 = scalar_lea.sflag [#allocation4], %s202
        %s204 = sand.u32 %s112, 1
        %s205 = smul.addr %s204, 8
        %s206 = scalar_lea.vmem [#allocation5], %s205
        %s207 = smul.u32 2, %s24
        %s208 = smul.u32 2, %s24
        %v209 = vld [vmem:[%s184] sm:$0xf]
        %v210 = vld [vmem:[%s184 + $0x4] sm:$0xf]
        %vm211 = vcmask 1043456
        %v212 = vsel %vm211, %v209, 0.0
        %v213 = vrot.slane %v212, 4
        %v214 = vadd.f32 %v212, %v213
        %v215 = vrot.slane %v214, 2
        %v216 = vadd.f32 %v214, %v215
        %v217 = vrot.slane %v216, 1
        %v218 = vadd.f32 %v216, %v217
        %v219 = vsel %vm211, %v210, 0.0
        %v220 = vrot.slane %v219, 4
        %v221 = vadd.f32 %v219, %v220
        %v222 = vrot.slane %v221, 2
        %v223 = vadd.f32 %v221, %v222
        %v224 = vrot.slane %v223, 1
        %v225 = vadd.f32 %v223, %v224
        %v226 = vrcp.pop 4.0
        %v227 = vmul.f32 %v218, %v226
        %v228 = vmul.f32 %v225, %v226
        %v229 = vsub.f32 %v209, %v227
        %v230 = vsub.f32 %v210, %v228
        %v231 = vmul.f32 %v229, %v229
        %v232 = vmul.f32 %v230, %v230
        %v233 = vsel %vm211, %v231, 0.0
        %v234 = vrot.slane %v233, 4
        %v235 = vadd.f32 %v233, %v234
        %v236 = vrot.slane %v235, 2
        %v237 = vadd.f32 %v235, %v236
        %v238 = vrot.slane %v237, 1
        %v239 = vadd.f32 %v237, %v238
        %v240 = vsel %vm211, %v232, 0.0
        %v241 = vrot.slane %v240, 4
        %v242 = vadd.f32 %v240, %v241
        %v243 = vrot.slane %v242, 2
        %v244 = vadd.f32 %v242, %v243
        %v245 = vrot.slane %v244, 1
        %v246 = vadd.f32 %v244, %v245
        %v247 = vmul.f32 %v239, %v226
        %v248 = vmul.f32 %v246, %v226
        %v249 = vadd.f32 %v247, 1e-05
        %v250 = vadd.f32 %v248, 1e-05
        %v251 = vrsqrt.pop %v249
        %v252 = vrsqrt.pop %v250
        %v253 = vmul.f32 %v229, %v251
        %v254 = vmul.f32 %v230, %v252
        %v255 = vld [vmem:[%s1] sm:$0xf]
        %257 = vset.pattern.permute.xlu0 0
        %258 = vperm.xlu0 %257, %v255
        %v259 = vpop.permute.xlu0 %258
        %v261 = vmul.f32 %v253, %v259
        %v262 = vmul.f32 %v254, %v259
        %v263 = vld [vmem:[%s2] sm:$0xf]
        %265 = vset.pattern.permute.xlu0 0
        %266 = vperm.xlu0 %265, %v263
        %v267 = vpop.permute.xlu0 %266
        %v269 = vadd.f32 %v261, %v267
        %v270 = vadd.f32 %v262, %v267
        %271 = vst [vmem:[%s206] sm:$0xf] %v269
        %272 = vst [vmem:[%s206 + $0x4] sm:$0xf] %v270
        %s273 = sand.u32 %s112, 1
        %s274 = scalar_lea.sflag [#allocation4], %s273
        %s275 = sand.u32 %s112, 1
        %s276 = smul.addr %s275, 8
        %s277 = scalar_lea.vmem [#allocation5], %s276
        // Predicated region
        $region37: #{tpu_custom_call.1} parent=31 // pred_check
          %p278 = pneg %p122
        $region38: #{tpu_custom_call.1} parent=31 // pred_check_branch
          %280 = sbr.rel (%p278) target = $region40
        $region39: #{tpu_custom_call.1} parent=31 // pred_region
          %s281 = smul.u32 2, %s24
          %s283 = ssub.s32 128, 128
          %284 = vsyncadd %s274, %s283
          %s285 = smul.addr %s281, 2
          %s286 = sadd.s32 %s25, %s285
          %s287 = smul.addr %s286, 64
          %s288 = scalar_lea.hbm %s3, %s287
          %s289 = sshll.u32 %s277, 4
          %s290 = int_to_ptr.vmem [resolvable:$true] %s289
          %295 = dma.vmem_to_hbm [thread:$0]  %s290, 128, %s288, %s274, 64, 128, 4
        $region40: #{tpu_custom_call.1} parent=31 // pred_fallthru
          _
      $region32: #{tpu_custom_call.1} parent=5 // pred_fallthru
        _
      %p296 = scmp.le.s32.totalorder 2, %s15
      // Predicated region
      $region41: #{tpu_custom_call.1} parent=5 // pred_check
        %p297 = pneg %p296
      $region42: #{tpu_custom_call.1} parent=5 // pred_check_branch
        %299 = sbr.rel (%p297) target = $region44
      $region43: #{tpu_custom_call.1} parent=5 // pred_region
        %s300 = ssub.s32 %s15, 2
        // Predicated region
        $region45: #{tpu_custom_call.1} parent=43 // pred_check
          %p301 = pneg %p128
        $region46: #{tpu_custom_call.1} parent=43 // pred_check_branch
          %303 = sbr.rel (%p301) target = $region48
        $region47: #{tpu_custom_call.1} parent=43 // pred_region
          %s304 = sand.u32 %s113, 1
          %s305 = scalar_lea.sflag [#allocation4], %s304
          %s306 = sand.u32 %s113, 1
          %s307 = smul.addr %s306, 8
          %s308 = scalar_lea.vmem [#allocation5], %s307
          %309 = dma.done %s305, 128
        $region48: #{tpu_custom_call.1} parent=43 // pred_fallthru
          _
      $region44: #{tpu_custom_call.1} parent=5 // pred_fallthru
        _
    $region6: #{tpu_custom_call.1} parent=1 // loop_footer
      %s19 = sadd.s32 1, %s15
    $region7: #{tpu_custom_call.1} parent=1 // loop_footer_branch
      %14 = sbr.rel target = $region3
    $region8: #{tpu_custom_call.1} parent=1 // loop_exit
      _
    %310 = vsyncpa [#allocation3], 1
    %s311 = scalar_lea.sflag [#allocation3], 1
    %312 = vsyncpa %s311, 1
    %313 = vsyncpa [#allocation4], 1
    %s314 = scalar_lea.sflag [#allocation4], 1
    %315 = vsyncpa %s314, 1

</llo_original>
